<compile_context>
chip_gen: v7x
topology: tpu7x:2x2x1
jax: 0.10.0
libtpu: 0.0.40
codegen_flags: <defaults>
</compile_context>

<pallas_src>
import jax
import jax.numpy as jnp
from jax.experimental import pallas as pl
from jax.experimental.pallas import tpu as pltpu

EXPANSION = 4


def _round_up(v, m):
    return (v + m - 1) // m * m


def _pad_channel(c):
    """Pad a channel count to a bf16 sublane multiple; align to the MXU tile
    (128) when the extra zero padding is cheap (<= ~12.5%)."""
    c16 = _round_up(c, 16)
    c128 = _round_up(c, 128)
    return c128 if (c128 - c) * 8 <= c else c16


def _vmem_capacity_bytes():
    try:
        info_fn = getattr(pltpu, "get_tpu_info", None)
        if info_fn is not None:
            cap = int(getattr(info_fn(), "vmem_capacity_bytes", 0))
            if cap > 0:
                return cap
    except Exception:
        pass
    return 64 * 1024 * 1024  # conservative default (v7x per-core VMEM)


def _choose_tiles(length, cin_p, p_p, cout_p, out_bytes):
    """Pick the lane tile TL (multiple of 128), padded length LP and VMEM limit.

    The per-step estimate includes the double-buffered x/out/halo blocks, the
    (conservatively double-buffered) weight blocks, and ~3 live f32
    intermediates.  Among tiles that fit the budget we trade per-step pipeline
    overhead (~0.35 us) against wasted length-padding writeback.
    """
    cap = _vmem_capacity_bytes()
    budget = max(20 * 1024 * 1024, cap // 2 - 8 * 1024 * 1024)
    w_bytes = 2 * 2 * (p_p * cin_p + 3 * p_p * p_p + cout_p * p_p + cout_p * cin_p)

    def est(t):
        return (w_bytes
                + 2 * cin_p * t * 2               # x block (bf16), double buffered
                + 2 * cout_p * t * out_bytes      # out block, double buffered
                + 2 * p_p * 128 * 4               # halo block (lane padded), double buffered
                + 3 * max(p_p, cout_p) * t * 4)   # live f32 intermediates

    lmin = _round_up(length, 128)
    best = None
    for cand in sorted({128, 256, 512, 1024, 2048, lmin}):
        t = min(cand, lmin)
        if est(t) > budget and t > 128:
            continue
        lp = _round_up(length, t)
        # cost ~ writeback columns + per-step overhead (in column equivalents)
        cost = lp + (lp // t) * 256
        key = (cost, -t)
        if best is None or key < best[0]:
            best = (key, t, lp)
    _, tl, lp = best
    limit = min(max(est(tl) + 8 * 1024 * 1024, 32 * 1024 * 1024),
                cap - 8 * 1024 * 1024)
    return tl, lp, int(limit)


def _conv1_conv2(x, halo, w1_ref, w2_ref):
    """conv1 (1x1) + ReLU and conv2 (k=3, pad=1) + ReLU on one (C, TL) tile.

    x    : (Cin_p, TL) bf16 activation tile.
    halo : (P_p, 2) f32 precomputed boundary contributions:
           halo[:, 0] = w2[0] @ relu(w1 @ x[global col l*TL - 1]) -> output col 0
           halo[:, 1] = w2[2] @ relu(w1 @ x[global col (l+1)*TL]) -> output col TL-1
    """
    # conv1: one MXU pass; bf16 result feeds the conv2 taps.
    h1 = jnp.maximum(
        jnp.dot(w1_ref[...], x, preferred_element_type=jnp.float32), 0.0
    ).astype(jnp.bfloat16)                                      # (P_p, TL)
    tl = h1.shape[1]

    # conv2: one aligned MXU pass per tap; the +-1 length shift is applied to
    # the tap result by concatenating the halo column; taps are accumulated
    # one at a time so at most ~2 (P, TL) f32 intermediates are live.
    acc = jnp.dot(w2_ref[1], h1, preferred_element_type=jnp.float32)
    y0 = jnp.dot(w2_ref[0], h1, preferred_element_type=jnp.float32)
    acc = acc + jnp.concatenate([halo[:, 0:1], y0[:, :tl - 1]], axis=1)
    y2 = jnp.dot(w2_ref[2], h1, preferred_element_type=jnp.float32)
    acc = acc + jnp.concatenate([y2[:, 1:], halo[:, 1:2]], axis=1)
    return jnp.maximum(acc, 0.0)                                # (P_p, TL) f32


def _bottleneck_proj_kernel(x_ref, halo_ref, w1_ref, w2_ref, w3_ref, wsc_ref, out_ref):
    """Variant with a 1x1 projection shortcut: conv3 + shortcut = 2 MXU passes."""
    x = x_ref[0]                                                # (Cin_p, TL) bf16
    h2 = _conv1_conv2(x, halo_ref[0, 0], w1_ref, w2_ref)
    h3 = jnp.dot(w3_ref[...], h2.astype(jnp.bfloat16),
                 preferred_element_type=jnp.float32)
    h3 = h3 + jnp.dot(wsc_ref[...], x, preferred_element_type=jnp.float32)
    cout = out_ref.shape[1]
    out_ref[0] = jnp.maximum(h3[:cout], 0.0).astype(out_ref.dtype)


def _bottleneck_id_kernel(x_ref, halo_ref, w1_ref, w2_ref, w3_ref, out_ref):
    """Variant with the empty (identity) shortcut: plain VPU add, no extra matmul."""
    x = x_ref[0]                                                # (Cout_p, TL) bf16
    h2 = _conv1_conv2(x, halo_ref[0, 0], w1_ref, w2_ref)
    h3 = jnp.dot(w3_ref[...], h2.astype(jnp.bfloat16),
                 preferred_element_type=jnp.float32)
    cout = out_ref.shape[1]
    # NOTE: residual uses the bf16-cast x (tiny rounding vs the f32 reference).
    out_ref[0] = jnp.maximum(h3[:cout] + x[:cout].astype(jnp.float32),
                             0.0).astype(out_ref.dtype)


def bottleneck_forward(x, w1, m1, w2, m2, w3, m3, wsc=None, msc=None,
                       out_dtype=jnp.bfloat16):
    """Bottleneck forward (stride=1). Weights/masks are in PyTorch (out, in, k) layout.

    wsc/msc is None  <=>  the PyTorch shortcut is the empty Sequential
    (i.e. in_planes == EXPANSION*planes and stride == 1).
    """
    # TODO(synk): stride > 1 (strided conv2 + strided shortcut) not implemented.
    n, cin, length = x.shape
    planes = w1.shape[0]
    cout = w3.shape[0]
    has_projection = wsc is not None
    if not has_projection:
        assert cin == cout, "empty shortcut requires in_planes == expansion*planes"

    # Effective (mask-applied) weights, reshaped for the kernel.
    w1e = (w1 * m1)[:, :, 0]                    # (P, Cin)
    w2e = jnp.transpose(w2 * m2, (2, 0, 1))     # (k, out, in) = (3, P, P)
    w3e = (w3 * m3)[:, :, 0]                    # (Cout, P)

    # Channel padding (zero rows/cols are no-ops); 128-aligned when it is cheap.
    cin_p, p_p, cout_p = (_pad_channel(c) for c in (cin, planes, cout))
    w1p = jnp.pad(w1e, ((0, p_p - planes), (0, cin_p - cin)))
    w2p = jnp.pad(w2e, ((0, 0), (0, p_p - planes), (0, p_p - planes)))
    w3p = jnp.pad(w3e, ((0, cout_p - cout), (0, p_p - planes)))

    out_bytes = jnp.dtype(out_dtype).itemsize
    tl, lp, vmem_limit = _choose_tiles(length, cin_p, p_p, cout_p, out_bytes)
    num_l = lp // tl

    # Pad L to a multiple of TL (>=128 -> lane-dense, unmasked stores).  The
    # zero pad is equivalent to conv2's own padding=1 at the right boundary.
    xp = jnp.pad(x, ((0, 0), (0, cin_p - cin), (0, lp - length))).astype(jnp.bfloat16)

    # Precompute the conv2 halo contributions for each length tile (one tiny
    # XLA einsum instead of three 2-lane MXU passes per grid step):
    #   halo[:, l, :, 0] = w2[0] @ relu(w1 @ x[:, :, l*TL - 1])   (0 at left edge)
    #   halo[:, l, :, 1] = w2[2] @ relu(w1 @ x[:, :, (l+1)*TL])   (0 at right edge)
    xpf = xp.astype(jnp.float32)
    zcol = jnp.zeros((n, cin_p, 1), jnp.float32)
    tile_last = xpf[:, :, tl - 1::tl]            # (N, Cin_p, num_l)
    tile_first = xpf[:, :, ::tl]                 # (N, Cin_p, num_l)
    x_left = jnp.concatenate([zcol, tile_last[:, :, :num_l - 1]], axis=2)
    x_right = jnp.concatenate([tile_first[:, :, 1:], zcol], axis=2)
    h1_left = jax.nn.relu(jnp.einsum('pc,ncl->npl', w1p, x_left))
    h1_right = jax.nn.relu(jnp.einsum('pc,ncl->npl', w1p, x_right))
    halo = jnp.stack([jnp.einsum('qp,npl->nql', w2p[0], h1_left),
                      jnp.einsum('qp,npl->nql', w2p[2], h1_right)], axis=-1)
    halo = jnp.transpose(halo, (0, 2, 1, 3))     # (N, num_l, P_p, 2) f32

    w1b = w1p.astype(jnp.bfloat16)
    w2b = w2p.astype(jnp.bfloat16)
    w3b = w3p.astype(jnp.bfloat16)

    full = lambda shp: pl.BlockSpec(shp, lambda *_: (0,) * len(shp))
    in_specs = [
        pl.BlockSpec((1, cin_p, tl), lambda b, l: (b, 0, l)),
        pl.BlockSpec((1, 1, p_p, 2), lambda b, l: (b, l, 0, 0)),
        full((p_p, cin_p)),
        full((3, p_p, p_p)),
        full((cout_p, p_p)),
    ]
    if has_projection:
        wscb = jnp.pad((wsc * msc)[:, :, 0],
                       ((0, cout_p - cout), (0, cin_p - cin))).astype(jnp.bfloat16)
        kernel = _bottleneck_proj_kernel
        in_specs.append(full((cout_p, cin_p)))
        weights = (w1b, w2b, w3b, wscb)
    else:
        kernel = _bottleneck_id_kernel
        weights = (w1b, w2b, w3b)

    # TODO(synk): when n*num_l < 2, fold batch rows into the lane axis (or split
    # Cout) so both v7x TensorCores always get work.
    out = pl.pallas_call(
        kernel,
        out_shape=jax.ShapeDtypeStruct((n, cout, lp), out_dtype),
        grid_spec=pltpu.PrefetchScalarGridSpec(
            num_scalar_prefetch=0,
            grid=(n, num_l),
            in_specs=in_specs,
            out_specs=pl.BlockSpec((1, cout, tl), lambda b, l: (b, 0, l)),
        ),
        compiler_params=pltpu.CompilerParams(
            dimension_semantics=("parallel", "parallel"),
            vmem_limit_bytes=vmem_limit,
        ),
    )(xp, halo, *weights)

    return out if lp == length else out[:, :, :length]


def reference_bottleneck(x, w1, m1, w2, m2, w3, m3, wsc=None, msc=None):
    """Pure-JAX f32 reference matching the PyTorch module (NCL layout, stride=1)."""
    w1e = (w1 * m1)[:, :, 0]
    w2e = jnp.transpose(w2 * m2, (2, 0, 1))
    w3e = (w3 * m3)[:, :, 0]
    length = x.shape[-1]
    h1 = jax.nn.relu(jnp.einsum('oc,ncl->nol', w1e, x))
    h1p = jnp.pad(h1, ((0, 0), (0, 0), (1, 1)))
    h2 = jax.nn.relu(sum(jnp.einsum('oc,ncl->nol', w2e[k], h1p[:, :, k:k + length])
                         for k in range(3)))
    h3 = jnp.einsum('oc,ncl->nol', w3e, h2)
    sc = x if wsc is None else jnp.einsum('oc,ncl->nol', (wsc * msc)[:, :, 0], x)
    return jax.nn.relu(h3 + sc)


if __name__ == "__main__":
    key = jax.random.PRNGKey(0)

    def make_params(k, in_planes, planes, with_projection):
        ks = jax.random.split(k, 8)
        cout = EXPANSION * planes
        w = lambda kk, shp: jax.random.normal(kk, shp, jnp.float32) * 0.1
        m = lambda kk, shp: (jax.random.uniform(kk, shp) > 0.2).astype(jnp.float32)
        w1 = w(ks[0], (planes, in_planes, 1)); m1 = m(ks[1], w1.shape)
        w2 = w(ks[2], (planes, planes, 3));    m2 = m(ks[3], w2.shape)
        w3 = w(ks[4], (cout, planes, 1));      m3 = m(ks[5], w3.shape)
        if with_projection:
            wsc = w(ks[6], (cout, in_planes, 1)); msc = m(ks[7], wsc.shape)
        else:
            wsc = msc = None
        return w1, m1, w2, m2, w3, m3, wsc, msc

    fwd = jax.jit(bottleneck_forward)

    cases = [
        ("projection", 2, 16, 8, 16),   # Cout=32 != Cin -> 1x1 projection shortcut
        ("identity",   2, 32, 8, 16),   # Cout=32 == Cin -> empty (identity) shortcut
    ]
    for name, batch, in_planes, planes, length in cases:
        kx, kp, key = jax.random.split(key, 3)
        x = jax.random.normal(kx, (batch, in_planes, length), jnp.float32)
        with_proj = in_planes != EXPANSION * planes
        params = make_params(kp, in_planes, planes, with_proj)

        out = jax.block_until_ready(fwd(x, *params))
        ref = reference_bottleneck(x, *params)

        assert out.shape == (batch, EXPANSION * planes, length), (name, out.shape)
        out_f32 = out.astype(jnp.float32)
        if not jnp.allclose(out_f32, ref, atol=5e-2, rtol=5e-2):
            err = float(jnp.max(jnp.abs(out_f32 - ref)))
            raise AssertionError(f"{name}: mismatch vs reference, max abs err {err}")

    print("KERNEL_OK")
</pallas_src>

<mosaic_0001>
module attributes {stable_mosaic.version = 11 : i64} {
  func.func @_bottleneck_proj_kernel(%arg0: i32, %arg1: i32, %arg2: memref<1x16x128xbf16, #tpu.memory_space<vmem>>, %arg3: memref<1x1x16x2xf32, #tpu.memory_space<vmem>>, %arg4: memref<16x16xbf16, #tpu.memory_space<vmem>>, %arg5: memref<3x16x16xbf16, #tpu.memory_space<vmem>>, %arg6: memref<32x16xbf16, #tpu.memory_space<vmem>>, %arg7: memref<32x16xbf16, #tpu.memory_space<vmem>>, %arg8: memref<1x32x128xbf16, #tpu.memory_space<vmem>>) attributes {dimension_semantics = [#tpu.dimension_semantics<parallel>, #tpu.dimension_semantics<parallel>], iteration_bounds = array<i64: 2, 1>, scalar_prefetch = 0 : i64, scratch_operands = 0 : i64, tpu.core_type = #tpu.core_type<tc>, window_params = [{transform_indices = @transform_0, window_bounds = array<i64: 1, 16, 128>}, {transform_indices = @transform_1, window_bounds = array<i64: 1, 1, 16, 2>}, {pipeline_mode = #tpu.pipeline_mode<synchronous>, transform_indices = @transform_2, window_bounds = array<i64: 16, 16>}, {pipeline_mode = #tpu.pipeline_mode<synchronous>, transform_indices = @transform_3, window_bounds = array<i64: 3, 16, 16>}, {pipeline_mode = #tpu.pipeline_mode<synchronous>, transform_indices = @transform_4, window_bounds = array<i64: 32, 16>}, {pipeline_mode = #tpu.pipeline_mode<synchronous>, transform_indices = @transform_5, window_bounds = array<i64: 32, 16>}, {transform_indices = @transform_6, window_bounds = array<i64: 1, 32, 128>}]} {
    %c0 = arith.constant 0 : index
    %c0_0 = arith.constant 0 : index
    %c0_1 = arith.constant 0 : index
    %0 = vector.load %arg2[%c0, %c0_0, %c0_1] : memref<1x16x128xbf16, #tpu.memory_space<vmem>>, vector<1x16x128xbf16>
    %1 = vector.shape_cast %0 : vector<1x16x128xbf16> to vector<16x128xbf16>
    %c0_2 = arith.constant 0 : index
    %c0_3 = arith.constant 0 : index
    %c0_4 = arith.constant 0 : index
    %c0_5 = arith.constant 0 : index
    %2 = vector.load %arg3[%c0_2, %c0_3, %c0_4, %c0_5] : memref<1x1x16x2xf32, #tpu.memory_space<vmem>>, vector<1x1x16x2xf32>
    %3 = vector.shape_cast %2 : vector<1x1x16x2xf32> to vector<16x2xf32>
    %c0_6 = arith.constant 0 : index
    %c0_7 = arith.constant 0 : index
    %4 = vector.load %arg4[%c0_6, %c0_7] : memref<16x16xbf16, #tpu.memory_space<vmem>>, vector<16x16xbf16>
    %cst = arith.constant dense<0.000000e+00> : vector<16x128xf32>
    %5 = tpu.matmul %4, %1, %cst {dimension_numbers = #tpu.dot_dimension_numbers<[1], [0], [0], [1], [0, 0, 1, 1], [], []>} : vector<16x16xbf16>, vector<16x128xbf16>, vector<16x128xf32> -> vector<16x128xf32>
    %cst_8 = arith.constant 0.000000e+00 : f32
    %6 = vector.broadcast %cst_8 : f32 to vector<16x128xf32>
    %7 = arith.maximumf %5, %6 : vector<16x128xf32>
    %8 = arith.truncf %7 : vector<16x128xf32> to vector<16x128xbf16>
    %c1 = arith.constant 1 : index
    %c0_9 = arith.constant 0 : index
    %c0_10 = arith.constant 0 : index
    %9 = vector.load %arg5[%c1, %c0_9, %c0_10] : memref<3x16x16xbf16, #tpu.memory_space<vmem>>, vector<1x16x16xbf16>
    %10 = vector.shape_cast %9 : vector<1x16x16xbf16> to vector<16x16xbf16>
    %cst_11 = arith.constant dense<0.000000e+00> : vector<16x128xf32>
    %11 = tpu.matmul %10, %8, %cst_11 {dimension_numbers = #tpu.dot_dimension_numbers<[1], [0], [0], [1], [0, 0, 1, 1], [], []>} : vector<16x16xbf16>, vector<16x128xbf16>, vector<16x128xf32> -> vector<16x128xf32>
    %c0_12 = arith.constant 0 : index
    %c0_13 = arith.constant 0 : index
    %c0_14 = arith.constant 0 : index
    %12 = vector.load %arg5[%c0_12, %c0_13, %c0_14] : memref<3x16x16xbf16, #tpu.memory_space<vmem>>, vector<1x16x16xbf16>
    %13 = vector.shape_cast %12 : vector<1x16x16xbf16> to vector<16x16xbf16>
    %cst_15 = arith.constant dense<0.000000e+00> : vector<16x128xf32>
    %14 = tpu.matmul %13, %8, %cst_15 {dimension_numbers = #tpu.dot_dimension_numbers<[1], [0], [0], [1], [0, 0, 1, 1], [], []>} : vector<16x16xbf16>, vector<16x128xbf16>, vector<16x128xf32> -> vector<16x128xf32>
    %15 = vector.extract_strided_slice %3 {offsets = [0, 0], sizes = [16, 1], strides = [1, 1]} : vector<16x2xf32> to vector<16x1xf32>
    %16 = vector.extract_strided_slice %14 {offsets = [0, 0], sizes = [16, 127], strides = [1, 1]} : vector<16x128xf32> to vector<16x127xf32>
    %17 = tpu.concatenate %15, %16 in 1 : vector<16x1xf32>, vector<16x127xf32> -> vector<16x128xf32>
    %18 = arith.addf %11, %17 : vector<16x128xf32>
    %c2 = arith.constant 2 : index
    %c0_16 = arith.constant 0 : index
    %c0_17 = arith.constant 0 : index
    %19 = vector.load %arg5[%c2, %c0_16, %c0_17] : memref<3x16x16xbf16, #tpu.memory_space<vmem>>, vector<1x16x16xbf16>
    %20 = vector.shape_cast %19 : vector<1x16x16xbf16> to vector<16x16xbf16>
    %cst_18 = arith.constant dense<0.000000e+00> : vector<16x128xf32>
    %21 = tpu.matmul %20, %8, %cst_18 {dimension_numbers = #tpu.dot_dimension_numbers<[1], [0], [0], [1], [0, 0, 1, 1], [], []>} : vector<16x16xbf16>, vector<16x128xbf16>, vector<16x128xf32> -> vector<16x128xf32>
    %22 = vector.extract_strided_slice %21 {offsets = [0, 1], sizes = [16, 127], strides = [1, 1]} : vector<16x128xf32> to vector<16x127xf32>
    %23 = vector.extract_strided_slice %3 {offsets = [0, 1], sizes = [16, 1], strides = [1, 1]} : vector<16x2xf32> to vector<16x1xf32>
    %24 = tpu.concatenate %22, %23 in 1 : vector<16x127xf32>, vector<16x1xf32> -> vector<16x128xf32>
    %25 = arith.addf %18, %24 : vector<16x128xf32>
    %cst_19 = arith.constant 0.000000e+00 : f32
    %26 = vector.broadcast %cst_19 : f32 to vector<16x128xf32>
    %27 = arith.maximumf %25, %26 : vector<16x128xf32>
    %c0_20 = arith.constant 0 : index
    %c0_21 = arith.constant 0 : index
    %28 = vector.load %arg6[%c0_20, %c0_21] : memref<32x16xbf16, #tpu.memory_space<vmem>>, vector<32x16xbf16>
    %29 = arith.truncf %27 : vector<16x128xf32> to vector<16x128xbf16>
    %cst_22 = arith.constant dense<0.000000e+00> : vector<32x128xf32>
    %30 = tpu.matmul %28, %29, %cst_22 {dimension_numbers = #tpu.dot_dimension_numbers<[1], [0], [0], [1], [0, 0, 1, 1], [], []>} : vector<32x16xbf16>, vector<16x128xbf16>, vector<32x128xf32> -> vector<32x128xf32>
    %c0_23 = arith.constant 0 : index
    %c0_24 = arith.constant 0 : index
    %31 = vector.load %arg7[%c0_23, %c0_24] : memref<32x16xbf16, #tpu.memory_space<vmem>>, vector<32x16xbf16>
    %cst_25 = arith.constant dense<0.000000e+00> : vector<32x128xf32>
    %32 = tpu.matmul %31, %1, %cst_25 {dimension_numbers = #tpu.dot_dimension_numbers<[1], [0], [0], [1], [0, 0, 1, 1], [], []>} : vector<32x16xbf16>, vector<16x128xbf16>, vector<32x128xf32> -> vector<32x128xf32>
    %33 = arith.addf %30, %32 : vector<32x128xf32>
    %cst_26 = arith.constant 0.000000e+00 : f32
    %34 = vector.broadcast %cst_26 : f32 to vector<32x128xf32>
    %35 = arith.maximumf %33, %34 : vector<32x128xf32>
    %36 = arith.truncf %35 : vector<32x128xf32> to vector<32x128xbf16>
    %c0_27 = arith.constant 0 : index
    %c0_28 = arith.constant 0 : index
    %c0_29 = arith.constant 0 : index
    %37 = vector.load %arg8[%c0_27, %c0_28, %c0_29] : memref<1x32x128xbf16, #tpu.memory_space<vmem>>, vector<1x32x128xbf16>
    %38 = vector.shape_cast %37 : vector<1x32x128xbf16> to vector<32x128xbf16>
    %39 = vector.shape_cast %36 : vector<32x128xbf16> to vector<1x32x128xbf16>
    tpu.vector_store %arg8[%c0_27, %c0_28, %c0_29], %39 {strides = array<i32>} : memref<1x32x128xbf16, #tpu.memory_space<vmem>>, vector<1x32x128xbf16>,
    return
  }
  func.func @transform_0(%arg0: i32, %arg1: i32) -> (i32, i32, i32) {
    %c0_i32 = arith.constant 0 : i32
    %c0_i32_0 = arith.constant 0 : i32
    return %arg0, %c0_i32, %arg1 : i32, i32, i32
  }
  func.func @transform_1(%arg0: i32, %arg1: i32) -> (i32, i32, i32, i32) {
    %c0_i32 = arith.constant 0 : i32
    %c0_i32_0 = arith.constant 0 : i32
    %c0_i32_1 = arith.constant 0 : i32
    return %arg0, %arg1, %c0_i32, %c0_i32_0 : i32, i32, i32, i32
  }
  func.func @transform_2(%arg0: i32, %arg1: i32) -> (i32, i32) {
    %c0_i32 = arith.constant 0 : i32
    %c0_i32_0 = arith.constant 0 : i32
    %c0_i32_1 = arith.constant 0 : i32
    return %c0_i32, %c0_i32_0 : i32, i32
  }
  func.func @transform_3(%arg0: i32, %arg1: i32) -> (i32, i32, i32) {
    %c0_i32 = arith.constant 0 : i32
    %c0_i32_0 = arith.constant 0 : i32
    %c0_i32_1 = arith.constant 0 : i32
    %c0_i32_2 = arith.constant 0 : i32
    return %c0_i32, %c0_i32_0, %c0_i32_1 : i32, i32, i32
  }
  func.func @transform_4(%arg0: i32, %arg1: i32) -> (i32, i32) {
    %c0_i32 = arith.constant 0 : i32
    %c0_i32_0 = arith.constant 0 : i32
    %c0_i32_1 = arith.constant 0 : i32
    return %c0_i32, %c0_i32_0 : i32, i32
  }
  func.func @transform_5(%arg0: i32, %arg1: i32) -> (i32, i32) {
    %c0_i32 = arith.constant 0 : i32
    %c0_i32_0 = arith.constant 0 : i32
    %c0_i32_1 = arith.constant 0 : i32
    return %c0_i32, %c0_i32_0 : i32, i32
  }
  func.func @transform_6(%arg0: i32, %arg1: i32) -> (i32, i32, i32) {
    %c0_i32 = arith.constant 0 : i32
    %c0_i32_0 = arith.constant 0 : i32
    return %arg0, %c0_i32, %arg1 : i32, i32, i32
  }
}

</mosaic_0001>

<llo_original>
// kernel: mul.6
$region0: #{mul.6}
  #allocation0 [shape = 's32[1]{0}', space=sflag, size = 0x4, scoped, tag = 'scoped memory for mul.6']
  %s0 = inlined_call_operand.vmem [shape: f32[32,8,1], index: 0, kind: input, shape index: {}]
  %s1 = inlined_call_operand.vmem [shape: f32[32,8,1], index: 1, kind: input, shape index: {}]
  %s2 = inlined_call_operand.vmem [shape: bf16[32,8,1], index: 2, kind: output, shape index: {}]
  %v3 = vld [vmem:[%s0] sm:$0xff]
  %v4 = vld [vmem:[%s1] sm:$0xff]
  %5 = xla_tuple %v3, %v4
  %6 = xla_tuple %5
  %v7 = vmul.f32 %v3, %v4
  %8 = xla_tuple %v7
  %v9 = vpack.c.bf16 0.0, %v7
  %10 = vst [vmem:[%s2] sm:$0xf] %v9

// kernel: mul.7
$region0: #{mul.7}
  #allocation0 [shape = 's32[1]{0}', space=sflag, size = 0x4, scoped, tag = 'scoped memory for mul.7']
  %s0 = inlined_call_operand.vmem [shape: f32[32,16,1], index: 0, kind: input, shape index: {}]
  %s1 = inlined_call_operand.vmem [shape: f32[32,16,1], index: 1, kind: input, shape index: {}]
  %s2 = inlined_call_operand.vmem [shape: bf16[32,16,1], index: 2, kind: output, shape index: {}]
  %v3 = vld [vmem:[%s0] sm:$0xff]
  %v4 = vld [vmem:[%s1] sm:$0xff]
  %5 = xla_tuple %v3, %v4
  %6 = xla_tuple %5
  %v7 = vmul.f32 %v3, %v4
  %8 = xla_tuple %v7
  %v9 = vpack.c.bf16 0.0, %v7
  %10 = vst [vmem:[%s2] sm:$0xf] %v9
  %s11 = scalar_lea.vmem %s0, 8
  %v12 = vld [vmem:[%s11] sm:$0xff]
  %s13 = scalar_lea.vmem %s1, 8
  %v14 = vld [vmem:[%s13] sm:$0xff]
  %15 = xla_tuple %v12, %v14
  %16 = xla_tuple %15
  %v17 = vmul.f32 %v12, %v14
  %18 = xla_tuple %v17
  %s19 = scalar_lea.vmem %s2, 4
  %v20 = vpack.c.bf16 0.0, %v17
  %21 = vst [vmem:[%s19] sm:$0xf] %v20

// kernel: bottleneck_forward.1
$region0: #{bottleneck_forward.1}
  #allocation0 [shape = 'u32[]', space=smem, size = 0x4, offset = 0x4, fixed_abs, tag = 'smem constant byte address 0x4 - core index']
  #allocation1 [shape = 'u32[144,128]{1,0:T(1,128)}', space=vmem, size = 0x12000, scoped, tag = 'internal scratch']
  %s0 = inlined_call_operand.vmem [shape: bf16[2,16,128], index: 0, kind: input, shape index: {}]
  %s1 = inlined_call_operand.vmem [shape: f32[2,1,16,2], index: 1, kind: input, shape index: {}]
  %s2 = inlined_call_operand.vmem [shape: bf16[16,16], index: 2, kind: input, shape index: {}]
  %s3 = inlined_call_operand.vmem [shape: bf16[3,16,16], index: 3, kind: input, shape index: {}]
  %s4 = inlined_call_operand.vmem [shape: bf16[32,16], index: 4, kind: input, shape index: {}]
  %s5 = inlined_call_operand.vmem [shape: bf16[32,16], index: 5, kind: input, shape index: {}]
  %s6 = inlined_call_operand.vmem [shape: bf16[2,32,128], index: 6, kind: output, shape index: {}]
  %s7 = sld [smem:[#allocation0]]
  $region57: #{bottleneck_forward.1} parent=0
    _
  %s9 = ssub.s32 1, %s7
  %s10 = scalar_select 0, %s9, %s7
  loop: start=0, step=1, limit=4
  $region2: #{bottleneck_forward.1} parent=0 // loop_pre_header
    _
  $region3: #{bottleneck_forward.1} parent=0 // loop_header
    %s12 = sphi 0, %s16
    %p13 = scmp.ge.s32.totalorder %s12, 4
    %s19 = sphi 0, %s31
    %s20 = sphi 0, %s27
    %s21 = sphi 0, %s19
    %s22 = sphi 0, %s20
    %s23 = sphi 0, %s21
    %s24 = sphi 0, %s22
    %s36 = sphi 0, %s38
    %s39 = sphi 0, %s36
    %s40 = sphi 0, %s39
    %s56 = sphi 0, %s40
    %s64 = sphi 0, %s66
    %s67 = sphi 0, %s64
    %s68 = sphi 0, %s67
    %s84 = sphi 0, %s68
    %s88 = sphi 0, %s88
    %s90 = sphi 0, %s88
    %s91 = sphi 0, %s90
    %s105 = sphi 0, %s91
    %s109 = sphi 0, %s109
    %s111 = sphi 0, %s109
    %s112 = sphi 0, %s111
    %s126 = sphi 0, %s112
    %s130 = sphi 0, %s130
    %s132 = sphi 0, %s130
    %s133 = sphi 0, %s132
    %s147 = sphi 0, %s133
    %s151 = sphi 0, %s151
    %s153 = sphi 0, %s151
    %s154 = sphi 0, %s153
    %s168 = sphi 0, %s154
    %s176 = sphi 0, %s178
    %s179 = sphi 0, %s176
    %s180 = sphi 0, %s179
    %s196 = sphi 0, %s180
  $region4: #{bottleneck_forward.1} parent=0 // loop_header_branch
    %15 = sbr.rel (%p13) target = $region8
  $region5: #{bottleneck_forward.1} parent=0 // loop_body
    %s17 = ssub.s32 %s12, 1
    %s18 = ssub.s32 %s12, 2
    %s25 = sadd.s32 1, %s20
    %p26 = scmp.ge.s32.totalorder %s25, 1
    %s27 = scalar_select %p26, 0, %s25
    %s28 = sadd.s32 1, %s19
    %s29 = scalar_select %p26, %s28, %s19
    %p30 = scmp.ge.s32.totalorder %s29, 2
    %s31 = scalar_select %p30, 0, %s29
    %s32 = ssub.s32 %s19, %s31
    %s33 = ssub.s32 %s20, %s27
    %s34 = sor.u32 %s32, %s33
    %p35 = scmp.eq.s32.totalorder %s34, 0
    %s37 = sadd.s32 %s36, 1
    %s38 = scalar_select %p35, %s36, %s37
    %p41 = pneg %p35
    %p42 = scmp.eq.s32.totalorder %s12, 1
    %p43 = por %p41, %p42
    %p44 = scmp.ne.s32.totalorder %s36, %s39
    %p45 = scmp.eq.s32.totalorder %s12, 0
    %p46 = por %p44, %p45
    %p47 = scmp.ne.s32.totalorder %s36, %s39
    %p48 = scmp.eq.s32.totalorder %s17, 1
    %p49 = por %p47, %p48
    %p50 = scmp.ne.s32.totalorder %s39, %s40
    %p51 = scmp.eq.s32.totalorder %s17, 0
    %p52 = por %p50, %p51
    %p53 = scmp.ne.s32.totalorder %s39, %s40
    %p54 = scmp.eq.s32.totalorder %s18, 1
    %p55 = por %p53, %p54
    %p57 = scmp.ne.s32.totalorder %s40, %s56
    %p58 = scmp.eq.s32.totalorder %s18, 0
    %p59 = por %p57, %p58
    %s60 = ssub.s32 %s19, %s31
    %s61 = ssub.s32 %s20, %s27
    %s62 = sor.u32 %s60, %s61
    %p63 = scmp.eq.s32.totalorder %s62, 0
    %s65 = sadd.s32 %s64, 1
    %s66 = scalar_select %p63, %s64, %s65
    %p69 = pneg %p63
    %p70 = scmp.eq.s32.totalorder %s12, 1
    %p71 = por %p69, %p70
    %p72 = scmp.ne.s32.totalorder %s64, %s67
    %p73 = scmp.eq.s32.totalorder %s12, 0
    %p74 = por %p72, %p73
    %p75 = scmp.ne.s32.totalorder %s64, %s67
    %p76 = scmp.eq.s32.totalorder %s17, 1
    %p77 = por %p75, %p76
    %p78 = scmp.ne.s32.totalorder %s67, %s68
    %p79 = scmp.eq.s32.totalorder %s17, 0
    %p80 = por %p78, %p79
    %p81 = scmp.ne.s32.totalorder %s67, %s68
    %p82 = scmp.eq.s32.totalorder %s18, 1
    %p83 = por %p81, %p82
    %p85 = scmp.ne.s32.totalorder %s68, %s84
    %p86 = scmp.eq.s32.totalorder %s18, 0
    %p87 = por %p85, %p86
    %s89 = sadd.s32 %s88, 1
    %p92 = scmp.eq.s32.totalorder %s12, 1
    %p93 = scmp.ne.s32.totalorder %s88, %s90
    %p94 = scmp.eq.s32.totalorder %s12, 0
    %p95 = por %p93, %p94
    %p96 = scmp.ne.s32.totalorder %s88, %s90
    %p97 = scmp.eq.s32.totalorder %s17, 1
    %p98 = por %p96, %p97
    %p99 = scmp.ne.s32.totalorder %s90, %s91
    %p100 = scmp.eq.s32.totalorder %s17, 0
    %p101 = por %p99, %p100
    %p102 = scmp.ne.s32.totalorder %s90, %s91
    %p103 = scmp.eq.s32.totalorder %s18, 1
    %p104 = por %p102, %p103
    %p106 = scmp.ne.s32.totalorder %s91, %s105
    %p107 = scmp.eq.s32.totalorder %s18, 0
    %p108 = por %p106, %p107
    %s110 = sadd.s32 %s109, 1
    %p113 = scmp.eq.s32.totalorder %s12, 1
    %p114 = scmp.ne.s32.totalorder %s109, %s111
    %p115 = scmp.eq.s32.totalorder %s12, 0
    %p116 = por %p114, %p115
    %p117 = scmp.ne.s32.totalorder %s109, %s111
    %p118 = scmp.eq.s32.totalorder %s17, 1
    %p119 = por %p117, %p118
    %p120 = scmp.ne.s32.totalorder %s111, %s112
    %p121 = scmp.eq.s32.totalorder %s17, 0
    %p122 = por %p120, %p121
    %p123 = scmp.ne.s32.totalorder %s111, %s112
    %p124 = scmp.eq.s32.totalorder %s18, 1
    %p125 = por %p123, %p124
    %p127 = scmp.ne.s32.totalorder %s112, %s126
    %p128 = scmp.eq.s32.totalorder %s18, 0
    %p129 = por %p127, %p128
    %s131 = sadd.s32 %s130, 1
    %p134 = scmp.eq.s32.totalorder %s12, 1
    %p135 = scmp.ne.s32.totalorder %s130, %s132
    %p136 = scmp.eq.s32.totalorder %s12, 0
    %p137 = por %p135, %p136
    %p138 = scmp.ne.s32.totalorder %s130, %s132
    %p139 = scmp.eq.s32.totalorder %s17, 1
    %p140 = por %p138, %p139
    %p141 = scmp.ne.s32.totalorder %s132, %s133
    %p142 = scmp.eq.s32.totalorder %s17, 0
    %p143 = por %p141, %p142
    %p144 = scmp.ne.s32.totalorder %s132, %s133
    %p145 = scmp.eq.s32.totalorder %s18, 1
    %p146 = por %p144, %p145
    %p148 = scmp.ne.s32.totalorder %s133, %s147
    %p149 = scmp.eq.s32.totalorder %s18, 0
    %p150 = por %p148, %p149
    %s152 = sadd.s32 %s151, 1
    %p155 = scmp.eq.s32.totalorder %s12, 1
    %p156 = scmp.ne.s32.totalorder %s151, %s153
    %p157 = scmp.eq.s32.totalorder %s12, 0
    %p158 = por %p156, %p157
    %p159 = scmp.ne.s32.totalorder %s151, %s153
    %p160 = scmp.eq.s32.totalorder %s17, 1
    %p161 = por %p159, %p160
    %p162 = scmp.ne.s32.totalorder %s153, %s154
    %p163 = scmp.eq.s32.totalorder %s17, 0
    %p164 = por %p162, %p163
    %p165 = scmp.ne.s32.totalorder %s153, %s154
    %p166 = scmp.eq.s32.totalorder %s18, 1
    %p167 = por %p165, %p166
    %p169 = scmp.ne.s32.totalorder %s154, %s168
    %p170 = scmp.eq.s32.totalorder %s18, 0
    %p171 = por %p169, %p170
    %s172 = ssub.s32 %s19, %s31
    %s173 = ssub.s32 %s20, %s27
    %s174 = sor.u32 %s172, %s173
    %p175 = scmp.eq.s32.totalorder %s174, 0
    %s177 = sadd.s32 %s176, 1
    %s178 = scalar_select %p175, %s176, %s177
    %p181 = pneg %p175
    %p182 = scmp.eq.s32.totalorder %s12, 1
    %p183 = por %p181, %p182
    %p184 = scmp.ne.s32.totalorder %s176, %s179
    %p185 = scmp.eq.s32.totalorder %s12, 0
    %p186 = por %p184, %p185
    %p187 = scmp.ne.s32.totalorder %s176, %s179
    %p188 = scmp.eq.s32.totalorder %s17, 1
    %p189 = por %p187, %p188
    %p190 = scmp.ne.s32.totalorder %s179, %s180
    %p191 = scmp.eq.s32.totalorder %s17, 0
    %p192 = por %p190, %p191
    %p193 = scmp.ne.s32.totalorder %s179, %s180
    %p194 = scmp.eq.s32.totalorder %s18, 1
    %p195 = por %p193, %p194
    %p197 = scmp.ne.s32.totalorder %s180, %s196
    %p198 = scmp.eq.s32.totalorder %s18, 0
    %p199 = por %p197, %p198
    %p200 = scmp.le.s32.totalorder 1, %s12
    %p201 = scmp.lt.s32.totalorder %s12, 3
    %p202 = pnand %p200, %p201
    %p203 = pneg %p202
    // Predicated region
    $region9: #{bottleneck_forward.1} parent=5 // pred_check
      _
    $region10: #{bottleneck_forward.1} parent=5 // pred_check_branch
      %205 = sbr.rel (%p202) target = $region12
    $region11: #{bottleneck_forward.1} parent=5 // pred_region
      %s206 = ssub.s32 %s12, 1
      // Predicated region
      $region13: #{bottleneck_forward.1} parent=11 // pred_check
        %p207 = pneg %p101
      $region14: #{bottleneck_forward.1} parent=11 // pred_check_branch
        %209 = sbr.rel (%p207) target = $region16
      $region15: #{bottleneck_forward.1} parent=11 // pred_region
        _
      $region16: #{bottleneck_forward.1} parent=11 // pred_fallthru
        _
      // Predicated region
      $region17: #{bottleneck_forward.1} parent=11 // pred_check
        %p210 = pneg %p122
      $region18: #{bottleneck_forward.1} parent=11 // pred_check_branch
        %212 = sbr.rel (%p210) target = $region20
      $region19: #{bottleneck_forward.1} parent=11 // pred_region
        _
      $region20: #{bottleneck_forward.1} parent=11 // pred_fallthru
        _
      // Predicated region
      $region21: #{bottleneck_forward.1} parent=11 // pred_check
        %p213 = pneg %p143
      $region22: #{bottleneck_forward.1} parent=11 // pred_check_branch
        %215 = sbr.rel (%p213) target = $region24
      $region23: #{bottleneck_forward.1} parent=11 // pred_region
        _
      $region24: #{bottleneck_forward.1} parent=11 // pred_fallthru
        _
      // Predicated region
      $region25: #{bottleneck_forward.1} parent=11 // pred_check
        %p216 = pneg %p164
      $region26: #{bottleneck_forward.1} parent=11 // pred_check_branch
        %218 = sbr.rel (%p216) target = $region28
      $region27: #{bottleneck_forward.1} parent=11 // pred_region
        _
      $region28: #{bottleneck_forward.1} parent=11 // pred_fallthru
        _
    $region12: #{bottleneck_forward.1} parent=5 // pred_fallthru
      _
    %p219 = scmp.lt.s32.totalorder %s12, 2
    // Predicated region
    $region29: #{bottleneck_forward.1} parent=5 // pred_check
      %p220 = pneg %p219
    $region30: #{bottleneck_forward.1} parent=5 // pred_check_branch
      %222 = sbr.rel (%p220) target = $region32
    $region31: #{bottleneck_forward.1} parent=5 // pred_region
      // Predicated region
      $region33: #{bottleneck_forward.1} parent=31 // pred_check
        %p223 = pneg %p46
      $region34: #{bottleneck_forward.1} parent=31 // pred_check_branch
        %225 = sbr.rel (%p223) target = $region36
      $region35: #{bottleneck_forward.1} parent=31 // pred_region
        %p226 = scmp.lt.s32.totalorder %s19, 1
        %s227 = scalar_select %p226, %s19, 1
        %p228 = scmp.lt.s32.totalorder %s20, 0
        %s229 = scalar_select %p228, %s20, 0
        %s230 = smul.addr %s227, 2
        %s231 = sadd.s32 %s229, %s230
        %s232 = smul.addr %s231, 4
        %s233 = scalar_lea.vmem %s0, %s232
      $region36: #{bottleneck_forward.1} parent=31 // pred_fallthru
        _
      // Predicated region
      $region37: #{bottleneck_forward.1} parent=31 // pred_check
        %p234 = pneg %p74
      $region38: #{bottleneck_forward.1} parent=31 // pred_check_branch
        %236 = sbr.rel (%p234) target = $region40
      $region39: #{bottleneck_forward.1} parent=31 // pred_region
        %p237 = scmp.lt.s32.totalorder %s19, 1
        %s238 = scalar_select %p237, %s19, 1
        %p239 = scmp.lt.s32.totalorder %s20, 0
        %s240 = scalar_select %p239, %s20, 0
        %s241 = smul.addr %s240, 2
        %s242 = smul.addr %s238, 2
        %s243 = sadd.s32 %s241, %s242
        %s244 = smul.addr %s243, 8
        %s245 = scalar_lea.vmem %s1, %s244
      $region40: #{bottleneck_forward.1} parent=31 // pred_fallthru
        _
    $region32: #{bottleneck_forward.1} parent=5 // pred_fallthru
      _
    %p246 = scmp.le.s32.totalorder 1, %s12
    %p247 = scmp.lt.s32.totalorder %s12, 3
    %p248 = pnand %p246, %p247
    %p249 = pneg %p248
    // Predicated region
    $region41: #{bottleneck_forward.1} parent=5 // pred_check
      _
    $region42: #{bottleneck_forward.1} parent=5 // pred_check_branch
      %251 = sbr.rel (%p248) target = $region44
    $region43: #{bottleneck_forward.1} parent=5 // pred_region
      %s252 = ssub.s32 %s12, 1
      %p253 = scmp.lt.s32.totalorder %s21, 1
      %s254 = scalar_select %p253, %s21, 1
      %p255 = scmp.lt.s32.totalorder %s22, 0
      %s256 = scalar_select %p255, %s22, 0
      %s257 = smul.addr %s254, 2
      %s258 = sadd.s32 %s256, %s257
      %s259 = smul.addr %s258, 4
      %s260 = scalar_lea.vmem %s0, %s259
      %p261 = pneg %p52
      %p262 = pneg %p49
      %p263 = scmp.lt.s32.totalorder %s21, 1
      %s264 = scalar_select %p263, %s21, 1
      %p265 = scmp.lt.s32.totalorder %s22, 0
      %s266 = scalar_select %p265, %s22, 0
      %s267 = smul.addr %s266, 2
      %s268 = smul.addr %s264, 2
      %s269 = sadd.s32 %s267, %s268
      %s270 = smul.addr %s269, 8
      %s271 = scalar_lea.vmem %s1, %s270
      %p272 = pneg %p80
      %p273 = pneg %p77
      %p274 = pneg %p101
      %p275 = pneg %p98
      %p276 = pneg %p122
      %p277 = pneg %p119
      %p278 = pneg %p143
      %p279 = pneg %p140
      %p280 = pneg %p164
      %p281 = pneg %p161
      %p282 = pneg %p192
      %p283 = pneg %p189
      %p284 = scmp.lt.s32.totalorder %s21, 1
      %s285 = scalar_select %p284, %s21, 1
      %p286 = scmp.lt.s32.totalorder %s22, 0
      %s287 = scalar_select %p286, %s22, 0
      %s288 = smul.addr %s285, 4
      %s289 = sadd.s32 %s287, %s288
      %s290 = smul.addr %s289, 4
      %s291 = scalar_lea.vmem %s6, %s290
      %p292 = scmp.lt.s32.totalorder %s21, 1
      %s293 = scalar_select %p292, %s21, 1
      %p294 = scmp.lt.s32.totalorder %s22, 0
      %s295 = scalar_select %p294, %s22, 0
      %s296 = smul.addr %s293, 2
      %s297 = sadd.s32 %s295, %s296
      %s298 = smul.addr %s297, 4
      %s299 = scalar_lea.vmem %s0, %s298
      %p300 = scmp.lt.s32.totalorder %s21, 1
      %s301 = scalar_select %p300, %s21, 1
      %p302 = scmp.lt.s32.totalorder %s22, 0
      %s303 = scalar_select %p302, %s22, 0
      %s304 = smul.addr %s303, 2
      %s305 = smul.addr %s301, 2
      %s306 = sadd.s32 %s304, %s305
      %s307 = smul.addr %s306, 8
      %s308 = scalar_lea.vmem %s1, %s307
      %p309 = scmp.lt.s32.totalorder %s21, 1
      %s310 = scalar_select %p309, %s21, 1
      %p311 = scmp.lt.s32.totalorder %s22, 0
      %s312 = scalar_select %p311, %s22, 0
      %s313 = smul.addr %s310, 4
      %s314 = sadd.s32 %s312, %s313
      %s315 = smul.addr %s314, 4
      %s316 = scalar_lea.vmem %s6, %s315
      %v318 = vld [vmem:[%s299] sm:$0xf]
      %v319 = vld [vmem:[%s299 + $0x4] sm:$0xf]
      %v320 = vld [vmem:[%s308] sm:$0xff]
      %v321 = vld [vmem:[%s308 + $0x8] sm:$0xff]
      %v322 = vld [vmem:[%s2] sm:$0xf]
      %v323 = vld [vmem:[%s2 + $0x4] sm:$0xf]
      %v326 = vunpack.c.l.b16 %v322
      %v327 = vunpack.c.l.b16 %v323
      %v328 = vpack.c.b16 %v327, %v326
      %v331 = vunpack.c.l.b16 %v318
      %v332 = vunpack.c.l.b16 %v319
      %v333 = vpack.c.b16 %v332, %v331
      %vm335 = vcmask 130048
      %v337 = vsel %vm335, %v328, 0
      %339 = vmatprep.subr.bf16.mxu0 0
      %340 = vmatpush1.bf16.msra.mxu0 %v333
      %341 = vmatprep.subr.bf16.mxu0 0
      %342 = vmatpush1.bf16.msra.mxu0 0
      %343 = vmatprep.subr.bf16.mxu0 0
      %344 = vmatpush1.bf16.msra.mxu0 0
      %345 = vmatprep.subr.bf16.mxu0 0
      %346 = vmatpush1.bf16.msra.mxu0 0
      %347 = vmatprep.subr.bf16.mxu0 0
      %348 = vmatpush1.bf16.msra.mxu0 0
      %349 = vmatprep.subr.bf16.mxu0 0
      %350 = vmatpush1.bf16.msra.mxu0 0
      %351 = vmatprep.subr.bf16.mxu0 0
      %352 = vmatpush1.bf16.msra.mxu0 0
      %353 = vmatprep.subr.bf16.mxu0 0
      %354 = vmatpush1.bf16.msra.mxu0 0
      %355 = vmatprep.subr.bf16.mxu0 0
      %356 = vmatpush1.bf16.msra.mxu0 0
      %357 = vmatprep.subr.bf16.mxu0 0
      %358 = vmatpush1.bf16.msra.mxu0 0
      %359 = vmatprep.subr.bf16.mxu0 0
      %360 = vmatpush1.bf16.msra.mxu0 0
      %361 = vmatprep.subr.bf16.mxu0 0
      %362 = vmatpush1.bf16.msra.mxu0 0
      %363 = vmatprep.subr.bf16.mxu0 0
      %364 = vmatpush1.bf16.msra.mxu0 0
      %365 = vmatprep.subr.bf16.mxu0 0
      %366 = vmatpush1.bf16.msra.mxu0 0
      %367 = vmatprep.subr.bf16.mxu0 0
      %368 = vmatpush1.bf16.msra.mxu0 0
      %369 = vmatprep.subr.bf16.mxu0 0
      %370 = vmatpush1.bf16.msra.mxu0 0
      %371 = vmatprep.mubr.bf16.mxu0 0
      %372 = vmatmul.mubr.bf16.gmra.mrb[0].mxu0 %v337
      %v373 = vpop.f32.mrb[0].mxu0
      %v374 = vadd.f32 0.0, %v373
      %v375 = vpop.f32.mrb[0].mxu0
      %v376 = vpop.f32.mrb[0].mxu0
      %v377 = vadd.f32 0.0, %v376
      %v378 = vpop.f32.mrb[0].mxu0
      %379 = vdwg.mxu0
      %v380 = vmax.f32 %v374, 0.0
      %v381 = vmax.f32 %v377, 0.0
      %v382 = vpack.c.bf16 %v381, %v380
      %s383 = scalar_lea.vmem %s3, 8
      %v384 = vld [vmem:[%s383] sm:$0xf]
      %v385 = vld [vmem:[%s383 + $0x4] sm:$0xf]
      %v386 = vld [vmem:[%s3] sm:$0xf]
      %v387 = vld [vmem:[%s3 + $0x4] sm:$0xf]
      %v390 = vunpack.c.l.b16 %v386
      %v391 = vunpack.c.l.b16 %v387
      %v392 = vpack.c.b16 %v391, %v390
      %v394 = vsel %vm335, %v392, 0
      %396 = vmatprep.subr.bf16.mxu0 0
      %397 = vmatpush1.bf16.msra.mxu0 %v382
      %398 = vmatprep.subr.bf16.mxu0 0
      %399 = vmatpush1.bf16.msra.mxu0 0
      %400 = vmatprep.subr.bf16.mxu0 0
      %401 = vmatpush1.bf16.msra.mxu0 0
      %402 = vmatprep.subr.bf16.mxu0 0
      %403 = vmatpush1.bf16.msra.mxu0 0
      %404 = vmatprep.subr.bf16.mxu0 0
      %405 = vmatpush1.bf16.msra.mxu0 0
      %406 = vmatprep.subr.bf16.mxu0 0
      %407 = vmatpush1.bf16.msra.mxu0 0
      %408 = vmatprep.subr.bf16.mxu0 0
      %409 = vmatpush1.bf16.msra.mxu0 0
      %410 = vmatprep.subr.bf16.mxu0 0
      %411 = vmatpush1.bf16.msra.mxu0 0
      %412 = vmatprep.subr.bf16.mxu0 0
      %413 = vmatpush1.bf16.msra.mxu0 0
      %414 = vmatprep.subr.bf16.mxu0 0
      %415 = vmatpush1.bf16.msra.mxu0 0
      %416 = vmatprep.subr.bf16.mxu0 0
      %417 = vmatpush1.bf16.msra.mxu0 0
      %418 = vmatprep.subr.bf16.mxu0 0
      %419 = vmatpush1.bf16.msra.mxu0 0
      %420 = vmatprep.subr.bf16.mxu0 0
      %421 = vmatpush1.bf16.msra.mxu0 0
      %422 = vmatprep.subr.bf16.mxu0 0
      %423 = vmatpush1.bf16.msra.mxu0 0
      %424 = vmatprep.subr.bf16.mxu0 0
      %425 = vmatpush1.bf16.msra.mxu0 0
      %426 = vmatprep.subr.bf16.mxu0 0
      %427 = vmatpush1.bf16.msra.mxu0 0
      %428 = vmatprep.mubr.bf16.mxu0 0
      %429 = vmatmul.mubr.bf16.gmra.mrb[0].mxu0 %v394
      %v430 = vpop.f32.mrb[0].mxu0
      %v431 = vadd.f32 0.0, %v430
      %v432 = vpop.f32.mrb[0].mxu0
      %v433 = vpop.f32.mrb[0].mxu0
      %v434 = vadd.f32 0.0, %v433
      %v435 = vpop.f32.mrb[0].mxu0
      %436 = vdwg.mxu0
      %439 = vrot.lane.b32.xlu0 %v431, 1
      %v440 = vpop.permute.xlu0 %439
      %441 = vrot.lane.b32.xlu0 %v434, 1
      %v442 = vpop.permute.xlu0 %441
      %vm445 = vcmask 7168
      %v446 = vsel %vm445, %v320, %v440
      %v447 = vsel %vm445, %v321, %v442
      %v450 = vunpack.c.l.b16 %v384
      %v451 = vunpack.c.l.b16 %v385
      %v452 = vpack.c.b16 %v451, %v450
      %v454 = vsel %vm335, %v452, 0
      %456 = vmatprep.subr.bf16.mxu0 0
      %457 = vmatpush1.bf16.msra.mxu0 %v382
      %458 = vmatprep.subr.bf16.mxu0 0
      %459 = vmatpush1.bf16.msra.mxu0 0
      %460 = vmatprep.subr.bf16.mxu0 0
      %461 = vmatpush1.bf16.msra.mxu0 0
      %462 = vmatprep.subr.bf16.mxu0 0
      %463 = vmatpush1.bf16.msra.mxu0 0
      %464 = vmatprep.subr.bf16.mxu0 0
      %465 = vmatpush1.bf16.msra.mxu0 0
      %466 = vmatprep.subr.bf16.mxu0 0
      %467 = vmatpush1.bf16.msra.mxu0 0
      %468 = vmatprep.subr.bf16.mxu0 0
      %469 = vmatpush1.bf16.msra.mxu0 0
      %470 = vmatprep.subr.bf16.mxu0 0
      %471 = vmatpush1.bf16.msra.mxu0 0
      %472 = vmatprep.subr.bf16.mxu0 0
      %473 = vmatpush1.bf16.msra.mxu0 0
      %474 = vmatprep.subr.bf16.mxu0 0
      %475 = vmatpush1.bf16.msra.mxu0 0
      %476 = vmatprep.subr.bf16.mxu0 0
      %477 = vmatpush1.bf16.msra.mxu0 0
      %478 = vmatprep.subr.bf16.mxu0 0
      %479 = vmatpush1.bf16.msra.mxu0 0
      %480 = vmatprep.subr.bf16.mxu0 0
      %481 = vmatpush1.bf16.msra.mxu0 0
      %482 = vmatprep.subr.bf16.mxu0 0
      %483 = vmatpush1.bf16.msra.mxu0 0
      %484 = vmatprep.subr.bf16.mxu0 0
      %485 = vmatpush1.bf16.msra.mxu0 0
      %486 = vmatprep.subr.bf16.mxu0 0
      %487 = vmatpush1.bf16.msra.mxu0 0
      %488 = vmatprep.mubr.bf16.mxu0 0
      %489 = vmatmul.mubr.bf16.gmra.mrb[0].mxu0 %v454
      %v490 = vpop.f32.mrb[0].mxu0
      %v491 = vadd.f32 %v446, %v490
      %v492 = vpop.f32.mrb[0].mxu0
      %v493 = vpop.f32.mrb[0].mxu0
      %v494 = vadd.f32 %v447, %v493
      %v495 = vpop.f32.mrb[0].mxu0
      %496 = vdwg.mxu0
      %s497 = scalar_lea.vmem %s3, 16
      %v498 = vld [vmem:[%s497] sm:$0xf]
      %v499 = vld [vmem:[%s497 + $0x4] sm:$0xf]
      %v502 = vunpack.c.l.b16 %v498
      %v503 = vunpack.c.l.b16 %v499
      %v504 = vpack.c.b16 %v503, %v502
      %v506 = vsel %vm335, %v504, 0
      %508 = vmatprep.subr.bf16.mxu0 0
      %509 = vmatpush1.bf16.msra.mxu0 %v382
      %510 = vmatprep.subr.bf16.mxu0 0
      %511 = vmatpush1.bf16.msra.mxu0 0
      %512 = vmatprep.subr.bf16.mxu0 0
      %513 = vmatpush1.bf16.msra.mxu0 0
      %514 = vmatprep.subr.bf16.mxu0 0
      %515 = vmatpush1.bf16.msra.mxu0 0
      %516 = vmatprep.subr.bf16.mxu0 0
      %517 = vmatpush1.bf16.msra.mxu0 0
      %518 = vmatprep.subr.bf16.mxu0 0
      %519 = vmatpush1.bf16.msra.mxu0 0
      %520 = vmatprep.subr.bf16.mxu0 0
      %521 = vmatpush1.bf16.msra.mxu0 0
      %522 = vmatprep.subr.bf16.mxu0 0
      %523 = vmatpush1.bf16.msra.mxu0 0
      %524 = vmatprep.subr.bf16.mxu0 0
      %525 = vmatpush1.bf16.msra.mxu0 0
      %526 = vmatprep.subr.bf16.mxu0 0
      %527 = vmatpush1.bf16.msra.mxu0 0
      %528 = vmatprep.subr.bf16.mxu0 0
      %529 = vmatpush1.bf16.msra.mxu0 0
      %530 = vmatprep.subr.bf16.mxu0 0
      %531 = vmatpush1.bf16.msra.mxu0 0
      %532 = vmatprep.subr.bf16.mxu0 0
      %533 = vmatpush1.bf16.msra.mxu0 0
      %534 = vmatprep.subr.bf16.mxu0 0
      %535 = vmatpush1.bf16.msra.mxu0 0
      %536 = vmatprep.subr.bf16.mxu0 0
      %537 = vmatpush1.bf16.msra.mxu0 0
      %538 = vmatprep.subr.bf16.mxu0 0
      %539 = vmatpush1.bf16.msra.mxu0 0
      %540 = vmatprep.mubr.bf16.mxu0 0
      %541 = vmatmul.mubr.bf16.gmra.mrb[0].mxu0 %v506
      %v542 = vpop.f32.mrb[0].mxu0
      %v543 = vadd.f32 0.0, %v542
      %v544 = vpop.f32.mrb[0].mxu0
      %v545 = vpop.f32.mrb[0].mxu0
      %v546 = vadd.f32 0.0, %v545
      %v547 = vpop.f32.mrb[0].mxu0
      %548 = vdwg.mxu0
      %551 = vrot.lane.b32.xlu0 %v543, 127
      %v552 = vpop.permute.xlu0 %551
      %553 = vrot.lane.b32.xlu0 %v546, 127
      %v554 = vpop.permute.xlu0 %553
      %559 = vrot.lane.b32.xlu0 %v320, 126
      %v560 = vpop.permute.xlu0 %559
      %561 = vrot.lane.b32.xlu0 %v321, 126
      %v562 = vpop.permute.xlu0 %561
      %vm565 = vcmask 1039360
      %v566 = vsel %vm565, %v552, %v560
      %v567 = vsel %vm565, %v554, %v562
      %v568 = vadd.f32 %v491, %v566
      %v569 = vadd.f32 %v494, %v567
      %v570 = vmax.f32 %v568, 0.0
      %v571 = vmax.f32 %v569, 0.0
      %v572 = vld [vmem:[%s4] sm:$0xf]
      %v573 = vld [vmem:[%s4 + $0x4] sm:$0xf]
      %v574 = vld [vmem:[%s4 + $0x8] sm:$0xf]
      %v575 = vld [vmem:[%s4 + $0xc] sm:$0xf]
      %v576 = vpack.c.bf16 %v571, %v570
      %v577 = vld [vmem:[%s5] sm:$0xf]
      %v578 = vld [vmem:[%s5 + $0x4] sm:$0xf]
      %v579 = vld [vmem:[%s5 + $0x8] sm:$0xf]
      %v580 = vld [vmem:[%s5 + $0xc] sm:$0xf]
      %v585 = vunpack.c.l.b16 %v577
      %v586 = vunpack.c.l.b16 %v578
      %v587 = vunpack.c.l.b16 %v579
      %v588 = vunpack.c.l.b16 %v580
      %v589 = vpack.c.b16 %v586, %v585
      %v590 = vpack.c.b16 %v588, %v587
      %v592 = vsel %vm335, %v589, 0
      %v595 = vsel %vm335, %v590, 0
      %597 = vmatprep.subr.bf16.mxu0 0
      %598 = vmatpush1.bf16.msra.mxu0 %v333
      %599 = vmatprep.subr.bf16.mxu0 0
      %600 = vmatpush1.bf16.msra.mxu0 0
      %601 = vmatprep.subr.bf16.mxu0 0
      %602 = vmatpush1.bf16.msra.mxu0 0
      %603 = vmatprep.subr.bf16.mxu0 0
      %604 = vmatpush1.bf16.msra.mxu0 0
      %605 = vmatprep.subr.bf16.mxu0 0
      %606 = vmatpush1.bf16.msra.mxu0 0
      %607 = vmatprep.subr.bf16.mxu0 0
      %608 = vmatpush1.bf16.msra.mxu0 0
      %609 = vmatprep.subr.bf16.mxu0 0
      %610 = vmatpush1.bf16.msra.mxu0 0
      %611 = vmatprep.subr.bf16.mxu0 0
      %612 = vmatpush1.bf16.msra.mxu0 0
      %613 = vmatprep.subr.bf16.mxu0 0
      %614 = vmatpush1.bf16.msra.mxu0 0
      %615 = vmatprep.subr.bf16.mxu0 0
      %616 = vmatpush1.bf16.msra.mxu0 0
      %617 = vmatprep.subr.bf16.mxu0 0
      %618 = vmatpush1.bf16.msra.mxu0 0
      %619 = vmatprep.subr.bf16.mxu0 0
      %620 = vmatpush1.bf16.msra.mxu0 0
      %621 = vmatprep.subr.bf16.mxu0 0
      %622 = vmatpush1.bf16.msra.mxu0 0
      %623 = vmatprep.subr.bf16.mxu0 0
      %624 = vmatpush1.bf16.msra.mxu0 0
      %625 = vmatprep.subr.bf16.mxu0 0
      %626 = vmatpush1.bf16.msra.mxu0 0
      %627 = vmatprep.subr.bf16.mxu0 0
      %628 = vmatpush1.bf16.msra.mxu0 0
      %629 = vmatprep.mubr.bf16.mxu0 0
      %630 = vmatmul.mubr.bf16.gmra.mrb[0].mxu0 %v592
      %v631 = vpop.f32.mrb[0].mxu0
      %v632 = vadd.f32 0.0, %v631
      %v633 = vpop.f32.mrb[0].mxu0
      %v634 = vpop.f32.mrb[0].mxu0
      %v635 = vadd.f32 0.0, %v634
      %v636 = vpop.f32.mrb[0].mxu0
      %637 = vmatprep.mubr.bf16.mxu0 0
      %638 = vmatmul.mubr.bf16.gmra.mrb[0].mxu0 %v595
      %v639 = vpop.f32.mrb[0].mxu0
      %v640 = vadd.f32 0.0, %v639
      %v641 = vpop.f32.mrb[0].mxu0
      %v642 = vpop.f32.mrb[0].mxu0
      %v643 = vadd.f32 0.0, %v642
      %v644 = vpop.f32.mrb[0].mxu0
      %645 = vdwg.mxu0
      %v650 = vunpack.c.l.b16 %v572
      %v651 = vunpack.c.l.b16 %v573
      %v652 = vunpack.c.l.b16 %v574
      %v653 = vunpack.c.l.b16 %v575
      %v654 = vpack.c.b16 %v651, %v650
      %v655 = vpack.c.b16 %v653, %v652
      %v657 = vsel %vm335, %v654, 0
      %v660 = vsel %vm335, %v655, 0
      %662 = vmatprep.subr.bf16.mxu0 0
      %663 = vmatpush1.bf16.msra.mxu0 %v576
      %664 = vmatprep.subr.bf16.mxu0 0
      %665 = vmatpush1.bf16.msra.mxu0 0
      %666 = vmatprep.subr.bf16.mxu0 0
      %667 = vmatpush1.bf16.msra.mxu0 0
      %668 = vmatprep.subr.bf16.mxu0 0
      %669 = vmatpush1.bf16.msra.mxu0 0
      %670 = vmatprep.subr.bf16.mxu0 0
      %671 = vmatpush1.bf16.msra.mxu0 0
      %672 = vmatprep.subr.bf16.mxu0 0
      %673 = vmatpush1.bf16.msra.mxu0 0
      %674 = vmatprep.subr.bf16.mxu0 0
      %675 = vmatpush1.bf16.msra.mxu0 0
      %676 = vmatprep.subr.bf16.mxu0 0
      %677 = vmatpush1.bf16.msra.mxu0 0
      %678 = vmatprep.subr.bf16.mxu0 0
      %679 = vmatpush1.bf16.msra.mxu0 0
      %680 = vmatprep.subr.bf16.mxu0 0
      %681 = vmatpush1.bf16.msra.mxu0 0
      %682 = vmatprep.subr.bf16.mxu0 0
      %683 = vmatpush1.bf16.msra.mxu0 0
      %684 = vmatprep.subr.bf16.mxu0 0
      %685 = vmatpush1.bf16.msra.mxu0 0
      %686 = vmatprep.subr.bf16.mxu0 0
      %687 = vmatpush1.bf16.msra.mxu0 0
      %688 = vmatprep.subr.bf16.mxu0 0
      %689 = vmatpush1.bf16.msra.mxu0 0
      %690 = vmatprep.subr.bf16.mxu0 0
      %691 = vmatpush1.bf16.msra.mxu0 0
      %692 = vmatprep.subr.bf16.mxu0 0
      %693 = vmatpush1.bf16.msra.mxu0 0
      %694 = vmatprep.mubr.bf16.mxu0 0
      %695 = vmatmul.mubr.bf16.gmra.mrb[0].mxu0 %v657
      %v696 = vpop.f32.mrb[0].mxu0
      %v697 = vadd.f32 %v632, %v696
      %v698 = vpop.f32.mrb[0].mxu0
      %v699 = vpop.f32.mrb[0].mxu0
      %v700 = vadd.f32 %v635, %v699
      %v701 = vpop.f32.mrb[0].mxu0
      %702 = vmatprep.mubr.bf16.mxu0 0
      %703 = vmatmul.mubr.bf16.gmra.mrb[0].mxu0 %v660
      %v704 = vpop.f32.mrb[0].mxu0
      %v705 = vadd.f32 %v640, %v704
      %v706 = vpop.f32.mrb[0].mxu0
      %v707 = vpop.f32.mrb[0].mxu0
      %v708 = vadd.f32 %v643, %v707
      %v709 = vpop.f32.mrb[0].mxu0
      %710 = vdwg.mxu0
      %v711 = vmax.f32 %v697, 0.0
      %v712 = vmax.f32 %v700, 0.0
      %v713 = vmax.f32 %v705, 0.0
      %v714 = vmax.f32 %v708, 0.0
      %v715 = vpack.c.bf16 %v712, %v711
      %v716 = vpack.c.bf16 %v714, %v713
      %v719 = vunpack.c.l.b16 %v715
      %v720 = vunpack.c.h.b16 %v715
      %v721 = vunpack.c.l.b16 %v716
      %v722 = vunpack.c.h.b16 %v716
      %v723 = vpack.c.b16 %v719, %v719
      %v724 = vpack.c.b16 %v720, %v720
      %v725 = vpack.c.b16 %v721, %v721
      %v726 = vpack.c.b16 %v722, %v722
      %731 = vst [vmem:[%s316] sm:$0xf] %v723
      %732 = vst [vmem:[%s316 + $0x4] sm:$0xf] %v724
      %733 = vst [vmem:[%s316 + $0x8] sm:$0xf] %v725
      %734 = vst [vmem:[%s316 + $0xc] sm:$0xf] %v726
      %p735 = scmp.lt.s32.totalorder %s21, 1
      %s736 = scalar_select %p735, %s21, 1
      %p737 = scmp.lt.s32.totalorder %s22, 0
      %s738 = scalar_select %p737, %s22, 0
      %s739 = smul.addr %s736, 4
      %s740 = sadd.s32 %s738, %s739
      %s741 = smul.addr %s740, 4
      %s742 = scalar_lea.vmem %s6, %s741
      // Predicated region
      $region45: #{bottleneck_forward.1} parent=43 // pred_check
        %p743 = pneg %p189
      $region46: #{bottleneck_forward.1} parent=43 // pred_check_branch
        %745 = sbr.rel (%p743) target = $region48
      $region47: #{bottleneck_forward.1} parent=43 // pred_region
        _
      $region48: #{bottleneck_forward.1} parent=43 // pred_fallthru
        _
    $region44: #{bottleneck_forward.1} parent=5 // pred_fallthru
      _
    %p746 = scmp.le.s32.totalorder 2, %s12
    // Predicated region
    $region49: #{bottleneck_forward.1} parent=5 // pred_check
      %p747 = pneg %p746
    $region50: #{bottleneck_forward.1} parent=5 // pred_check_branch
      %749 = sbr.rel (%p747) target = $region52
    $region51: #{bottleneck_forward.1} parent=5 // pred_region
      %s750 = ssub.s32 %s12, 2
      // Predicated region
      $region53: #{bottleneck_forward.1} parent=51 // pred_check
        %p751 = pneg %p195
      $region54: #{bottleneck_forward.1} parent=51 // pred_check_branch
        %753 = sbr.rel (%p751) target = $region56
      $region55: #{bottleneck_forward.1} parent=51 // pred_region
        %p754 = scmp.lt.s32.totalorder %s23, 1
        %s755 = scalar_select %p754, %s23, 1
        %p756 = scmp.lt.s32.totalorder %s24, 0
        %s757 = scalar_select %p756, %s24, 0
        %s758 = smul.addr %s755, 4
        %s759 = sadd.s32 %s757, %s758
        %s760 = smul.addr %s759, 4
        %s761 = scalar_lea.vmem %s6, %s760
      $region56: #{bottleneck_forward.1} parent=51 // pred_fallthru
        _
    $region52: #{bottleneck_forward.1} parent=5 // pred_fallthru
      _
  $region6: #{bottleneck_forward.1} parent=0 // loop_footer
    %s16 = sadd.s32 1, %s12
  $region7: #{bottleneck_forward.1} parent=0 // loop_footer_branch
    %11 = sbr.rel target = $region3
  $region8: #{bottleneck_forward.1} parent=0 // loop_exit
    _

</llo_original>
